<compile_context>
chip_gen: v6e
topology: v6e:2x2x1
jax: 0.10.0
libtpu: 0.0.40
codegen_flags: <defaults>
</compile_context>

<pallas_src>
import jax
import jax.numpy as jnp
from jax.experimental import pallas as pl
from jax.experimental.pallas import tpu as pltpu


def _round_up(x, m):
    return (x + m - 1) // m * m


# ----------------------------- Pallas kernel -------------------------------

def _prefix_mlp_kernel(x_ref, w1_ref, b1_ref, w2_ref, b2_ref, o_ref):
    # x_ref:  (TN, kv_pad)  bf16      w1_ref: (kv_pad, h_pad)  bf16
    # b1_ref: (1, h_pad)    f32       w2_ref: (h_pad, kv_pad)  bf16
    # b2_ref: (1, kv_pad)   f32       o_ref:  (TN, kv_pad)     f32
    h = jnp.dot(x_ref[...], w1_ref[...], preferred_element_type=jnp.float32)
    h = jnp.tanh(h + b1_ref[...])                       # bias/tanh in f32 (EUP)
    y = jnp.dot(h.astype(jnp.bfloat16), w2_ref[...],
                preferred_element_type=jnp.float32)
    o_ref[...] = (y + b2_ref[...]).astype(o_ref.dtype)


@jax.jit
def prefix_encode_pallas(ids, emb_pad, w1, b1, w2, b2):
    """ids: (N,) int32; emb_pad: (V, kv_pad) bf16 (lane-padded table);
    w1: (kv_pad, h_pad) bf16; b1: (1, h_pad) f32;
    w2: (h_pad, kv_pad) bf16; b2: (1, kv_pad) f32.

    Returns (n_pad, kv_pad) f32 = Linear2(tanh(Linear1(Embed(ids)))); the
    caller slices off the row / lane padding."""
    n = ids.shape[0]
    kv_pad, h_pad = w1.shape
    assert w2.shape == (h_pad, kv_pad)

    # Big row tiles for MXU height; single full block when N is small.
    # Multiple of 16 keeps bf16 sublane tiling (16, 128) happy.
    row_tile = 256 if n >= 256 else max(16, _round_up(n, 16))
    n_pad = _round_up(n, row_tile)
    if n_pad > n:
        # Pad the id vector (with valid id 0) instead of padding the gathered
        # slab: the pad rows are sliced away by the caller.
        ids = jnp.pad(ids, (0, n_pad - n))

    # Gather straight out of the pre-padded bf16 table -> kernel-ready slab.
    x = jnp.take(emb_pad, ids, axis=0)                   # (n_pad, kv_pad) bf16

    grid = (n_pad // row_tile,)

    # VMEM budget: double-buffered x/out tiles + resident bf16 weights
    # (conservatively counted twice) + biases, with headroom.
    est = (2 * row_tile * kv_pad * 2            # x tiles (bf16)
           + 2 * row_tile * kv_pad * 4          # out tiles (f32)
           + 2 * 2 * kv_pad * h_pad * 2         # W1 + W2 (bf16), x2 buffers
           + 2 * 2 * (h_pad + kv_pad) * 4)      # biases (f32), x2 buffers
    vmem_limit = min(max(int(est * 1.5), 32 * 1024 * 1024), 64 * 1024 * 1024)

    out = pl.pallas_call(
        _prefix_mlp_kernel,
        out_shape=jax.ShapeDtypeStruct((n_pad, kv_pad), jnp.float32),
        grid_spec=pltpu.PrefetchScalarGridSpec(
            num_scalar_prefetch=0,
            grid=grid,
            in_specs=[
                pl.BlockSpec((row_tile, kv_pad), lambda i: (i, 0)),  # x tile
                pl.BlockSpec((kv_pad, h_pad), lambda i: (0, 0)),     # W1 (resident)
                pl.BlockSpec((1, h_pad), lambda i: (0, 0)),          # b1
                pl.BlockSpec((h_pad, kv_pad), lambda i: (0, 0)),     # W2 (resident)
                pl.BlockSpec((1, kv_pad), lambda i: (0, 0)),         # b2
            ],
            out_specs=pl.BlockSpec((row_tile, kv_pad), lambda i: (i, 0)),
        ),
        compiler_params=pltpu.CompilerParams(
            dimension_semantics=("parallel",),
            vmem_limit_bytes=vmem_limit),
    )(x, w1, b1, w2, b2)

    return out


# ----------------------------- module wrapper ------------------------------

class PrefixEncoderPallas:
    """JAX/Pallas re-implementation of BatGPT PrefixEncoder."""

    def __init__(self, *, prefix_size, n_layer, hidden_size, n_head,
                 num_heads_per_kv, prefix_proj=True, key=None):
        self.prefix_proj = prefix_proj
        head_dim = hidden_size // n_head
        kv_size = n_layer * head_dim * num_heads_per_kv * 2
        self.kv_size = kv_size
        self.hidden_size = hidden_size
        self.kv_pad = _round_up(kv_size, 128)
        self.h_pad = _round_up(hidden_size, 128)

        if key is None:
            key = jax.random.PRNGKey(0)
        k_emb, k_w1, k_b1, k_w2, k_b2 = jax.random.split(key, 5)

        # Deterministic synthetic parameters (shapes match the torch module).
        self.embedding = jax.random.normal(
            k_emb, (prefix_size, kv_size), jnp.float32) * 0.02

        if prefix_proj:
            # Stored as (in, out) == transpose of torch.nn.Linear.weight.
            self.w1 = jax.random.normal(
                k_w1, (kv_size, hidden_size), jnp.float32) * 0.02
            self.b1 = jax.random.normal(k_b1, (1, hidden_size), jnp.float32) * 0.02
            self.w2 = jax.random.normal(
                k_w2, (hidden_size, kv_size), jnp.float32) * 0.02
            self.b2 = jax.random.normal(k_b2, (1, kv_size), jnp.float32) * 0.02

            # Pre-padded (lane-dense) + bf16 copies fed to the kernel.
            # Done once at init, not per call.
            self.emb_p = jnp.pad(
                self.embedding,
                ((0, 0), (0, self.kv_pad - kv_size))).astype(jnp.bfloat16)
            self.w1_p = jnp.pad(
                self.w1, ((0, self.kv_pad - kv_size),
                          (0, self.h_pad - hidden_size))).astype(jnp.bfloat16)
            self.b1_p = jnp.pad(self.b1, ((0, 0), (0, self.h_pad - hidden_size)))
            self.w2_p = jnp.pad(
                self.w2, ((0, self.h_pad - hidden_size),
                          (0, self.kv_pad - kv_size))).astype(jnp.bfloat16)
            self.b2_p = jnp.pad(self.b2, ((0, 0), (0, self.kv_pad - kv_size)))

    def __call__(self, prefix):
        # prefix: (B, P) int32 token ids.
        b, p = prefix.shape
        n = b * p
        ids = prefix.reshape(-1)
        if not self.prefix_proj:
            tokens = jnp.take(self.embedding, ids, axis=0)
            return tokens.reshape(b, p, self.kv_size)
        out = prefix_encode_pallas(ids, self.emb_p, self.w1_p, self.b1_p,
                                   self.w2_p, self.b2_p)
        return out[:n, :self.kv_size].reshape(b, p, self.kv_size)

    # Pure-JAX f32 reference for verification.
    def reference(self, prefix):
        b, p = prefix.shape
        tokens = jnp.take(self.embedding, prefix.reshape(-1), axis=0)
        if not self.prefix_proj:
            return tokens.reshape(b, p, self.kv_size)
        h = jnp.tanh(tokens @ self.w1 + self.b1)
        y = h @ self.w2 + self.b2
        return y.reshape(b, p, self.kv_size)


# --------------------------------- main -------------------------------------

if __name__ == "__main__":
    # Small config: hidden_size=32, n_head=4 -> head_dim=8;
    # n_layer=2, num_heads_per_kv=2 -> kv_size = 2*8*2*2 = 64.
    # B*P = 12 exercises the row-padding path.
    B, P = 2, 6
    PREFIX_SIZE = 16

    key = jax.random.PRNGKey(0)
    k_params, k_ids = jax.random.split(key)

    enc = PrefixEncoderPallas(
        prefix_size=PREFIX_SIZE, n_layer=2, hidden_size=32, n_head=4,
        num_heads_per_kv=2, prefix_proj=True, key=k_params)

    prefix = jax.random.randint(k_ids, (B, P), 0, PREFIX_SIZE, dtype=jnp.int32)

    out = enc(prefix)
    out = jax.block_until_ready(out)

    ref = jax.block_until_ready(enc.reference(prefix))
    assert out.shape == (B, P, enc.kv_size), out.shape
    # bf16 MXU inputs (incl. bf16 embedding gather) with f32 accumulation vs
    # pure-f32 reference.
    assert jnp.allclose(out, ref, atol=1e-2, rtol=1e-2), "mismatch vs reference"

    print("KERNEL_OK")
</pallas_src>

<mosaic_0001>
module attributes {stable_mosaic.version = 11 : i64} {
  func.func @_prefix_mlp_kernel(%arg0: i32, %arg1: memref<16x128xbf16, #tpu.memory_space<vmem>>, %arg2: memref<128x128xbf16, #tpu.memory_space<vmem>>, %arg3: memref<1x128xf32, #tpu.memory_space<vmem>>, %arg4: memref<128x128xbf16, #tpu.memory_space<vmem>>, %arg5: memref<1x128xf32, #tpu.memory_space<vmem>>, %arg6: memref<16x128xf32, #tpu.memory_space<vmem>>) attributes {dimension_semantics = [#tpu.dimension_semantics<parallel>], iteration_bounds = array<i64: 1>, scalar_prefetch = 0 : i64, scratch_operands = 0 : i64, tpu.core_type = #tpu.core_type<tc>, window_params = [{transform_indices = @transform_0, window_bounds = array<i64: 16, 128>}, {pipeline_mode = #tpu.pipeline_mode<synchronous>, transform_indices = @transform_1, window_bounds = array<i64: 128, 128>}, {pipeline_mode = #tpu.pipeline_mode<synchronous>, transform_indices = @transform_2, window_bounds = array<i64: 1, 128>}, {pipeline_mode = #tpu.pipeline_mode<synchronous>, transform_indices = @transform_3, window_bounds = array<i64: 128, 128>}, {pipeline_mode = #tpu.pipeline_mode<synchronous>, transform_indices = @transform_4, window_bounds = array<i64: 1, 128>}, {transform_indices = @transform_5, window_bounds = array<i64: 16, 128>}]} {
    %c0 = arith.constant 0 : index
    %c0_0 = arith.constant 0 : index
    %0 = vector.load %arg1[%c0, %c0_0] : memref<16x128xbf16, #tpu.memory_space<vmem>>, vector<16x128xbf16>
    %c0_1 = arith.constant 0 : index
    %c0_2 = arith.constant 0 : index
    %1 = vector.load %arg2[%c0_1, %c0_2] : memref<128x128xbf16, #tpu.memory_space<vmem>>, vector<128x128xbf16>
    %cst = arith.constant dense<0.000000e+00> : vector<16x128xf32>
    %2 = tpu.matmul %0, %1, %cst {dimension_numbers = #tpu.dot_dimension_numbers<[1], [0], [0], [1], [0, 0, 1, 1], [], []>} : vector<16x128xbf16>, vector<128x128xbf16>, vector<16x128xf32> -> vector<16x128xf32>
    %c0_3 = arith.constant 0 : index
    %c0_4 = arith.constant 0 : index
    %3 = vector.load %arg3[%c0_3, %c0_4] : memref<1x128xf32, #tpu.memory_space<vmem>>, vector<1x128xf32>
    %4 = vector.broadcast %3 : vector<1x128xf32> to vector<16x128xf32>
    %5 = arith.addf %2, %4 : vector<16x128xf32>
    %6 = math.tanh %5 : vector<16x128xf32>
    %7 = arith.truncf %6 : vector<16x128xf32> to vector<16x128xbf16>
    %c0_5 = arith.constant 0 : index
    %c0_6 = arith.constant 0 : index
    %8 = vector.load %arg4[%c0_5, %c0_6] : memref<128x128xbf16, #tpu.memory_space<vmem>>, vector<128x128xbf16>
    %cst_7 = arith.constant dense<0.000000e+00> : vector<16x128xf32>
    %9 = tpu.matmul %7, %8, %cst_7 {dimension_numbers = #tpu.dot_dimension_numbers<[1], [0], [0], [1], [0, 0, 1, 1], [], []>} : vector<16x128xbf16>, vector<128x128xbf16>, vector<16x128xf32> -> vector<16x128xf32>
    %c0_8 = arith.constant 0 : index
    %c0_9 = arith.constant 0 : index
    %10 = vector.load %arg5[%c0_8, %c0_9] : memref<1x128xf32, #tpu.memory_space<vmem>>, vector<1x128xf32>
    %11 = vector.broadcast %10 : vector<1x128xf32> to vector<16x128xf32>
    %12 = arith.addf %9, %11 : vector<16x128xf32>
    %c0_10 = arith.constant 0 : index
    %c0_11 = arith.constant 0 : index
    %13 = vector.load %arg6[%c0_10, %c0_11] : memref<16x128xf32, #tpu.memory_space<vmem>>, vector<16x128xf32>
    tpu.vector_store %arg6[%c0_10, %c0_11], %12 {strides = array<i32>} : memref<16x128xf32, #tpu.memory_space<vmem>>, vector<16x128xf32>,
    return
  }
  func.func @transform_0(%arg0: i32) -> (i32, i32) {
    %c0_i32 = arith.constant 0 : i32
    %c0_i32_0 = arith.constant 0 : i32
    return %arg0, %c0_i32 : i32, i32
  }
  func.func @transform_1(%arg0: i32) -> (i32, i32) {
    %c0_i32 = arith.constant 0 : i32
    %c0_i32_0 = arith.constant 0 : i32
    %c0_i32_1 = arith.constant 0 : i32
    return %c0_i32, %c0_i32_0 : i32, i32
  }
  func.func @transform_2(%arg0: i32) -> (i32, i32) {
    %c0_i32 = arith.constant 0 : i32
    %c0_i32_0 = arith.constant 0 : i32
    %c0_i32_1 = arith.constant 0 : i32
    return %c0_i32, %c0_i32_0 : i32, i32
  }
  func.func @transform_3(%arg0: i32) -> (i32, i32) {
    %c0_i32 = arith.constant 0 : i32
    %c0_i32_0 = arith.constant 0 : i32
    %c0_i32_1 = arith.constant 0 : i32
    return %c0_i32, %c0_i32_0 : i32, i32
  }
  func.func @transform_4(%arg0: i32) -> (i32, i32) {
    %c0_i32 = arith.constant 0 : i32
    %c0_i32_0 = arith.constant 0 : i32
    %c0_i32_1 = arith.constant 0 : i32
    return %c0_i32, %c0_i32_0 : i32, i32
  }
  func.func @transform_5(%arg0: i32) -> (i32, i32) {
    %c0_i32 = arith.constant 0 : i32
    %c0_i32_0 = arith.constant 0 : i32
    return %arg0, %c0_i32 : i32, i32
  }
}

</mosaic_0001>

<llo_original>
// kernel: prefix_encode_pallas.1
$region0: #{prefix_encode_pallas.1}
  #allocation0 [shape = 'u32[]', space=smem, size = 0x4, offset = 0x4, fixed_abs, tag = 'smem constant byte address 0x4 - core index']
  #allocation1 [shape = 'u32[144,128]{1,0:T(1,128)}', space=vmem, size = 0x12000, scoped, tag = 'internal scratch']
  %s0 = inlined_call_operand.vmem [shape: bf16[16,128], index: 0, kind: input, shape index: {}]
  %s1 = inlined_call_operand.vmem [shape: bf16[128,128], index: 1, kind: input, shape index: {}]
  %s2 = inlined_call_operand.vmem [shape: f32[1,128], index: 2, kind: input, shape index: {}]
  %s3 = inlined_call_operand.hbm [shape: bf16[128,128], index: 3, kind: input, shape index: {}]
  %s4 = inlined_call_operand.vmem [shape: f32[1,128], index: 4, kind: input, shape index: {}]
  %s5 = inlined_call_operand.hbm [shape: f32[16,128], index: 5, kind: output, shape index: {}]
  %s6 = sld [smem:[#allocation0]]
  $region34: #{prefix_encode_pallas.1} parent=0
    _
  %s8 = ssub.s32 1, %s6
  %s9 = scalar_select 0, %s8, %s6
  $region1: #{prefix_encode_pallas.1} parent=0
    #allocation2 [shape = 'u8[32768]{0}', space=vmem, size = 0x8000, scoped, tag = 'input window, operand 3, single buffered']
    #allocation3 [shape = 's32[1]{0}', space=sflag, size = 0x4, scoped, tag = 'scoped memory for prefix_encode_pallas.1']
    #allocation4 [shape = 's32[1]{0}', space=sflag, size = 0x4, scoped, tag = 'scoped memory for prefix_encode_pallas.1']
    #allocation5 [shape = 'u8[8192]{0}', space=vmem, size = 0x2000, scoped, tag = 'output window, operand 0, single buffered']
    %10 = vsyncpa [#allocation3], 0
    %11 = vsyncpa [#allocation4], 0
    // Predicated region
    $region2: #{prefix_encode_pallas.1} parent=1 // pred_check
      _
    $region3: #{prefix_encode_pallas.1} parent=1 // pred_check_branch
      %13 = sbr.rel (0) target = $region5
    $region4: #{prefix_encode_pallas.1} parent=1 // pred_region
      _
    $region5: #{prefix_encode_pallas.1} parent=1 // pred_fallthru
      _
    // Predicated region
    $region6: #{prefix_encode_pallas.1} parent=1 // pred_check
      _
    $region7: #{prefix_encode_pallas.1} parent=1 // pred_check_branch
      %15 = sbr.rel (0) target = $region9
    $region8: #{prefix_encode_pallas.1} parent=1 // pred_region
      _
    $region9: #{prefix_encode_pallas.1} parent=1 // pred_fallthru
      _
    // Predicated region
    $region10: #{prefix_encode_pallas.1} parent=1 // pred_check
      _
    $region11: #{prefix_encode_pallas.1} parent=1 // pred_check_branch
      %17 = sbr.rel (0) target = $region13
    $region12: #{prefix_encode_pallas.1} parent=1 // pred_region
      _
    $region13: #{prefix_encode_pallas.1} parent=1 // pred_fallthru
      _
    // Predicated region
    $region14: #{prefix_encode_pallas.1} parent=1 // pred_check
      _
    $region15: #{prefix_encode_pallas.1} parent=1 // pred_check_branch
      %19 = sbr.rel (0) target = $region17
    $region16: #{prefix_encode_pallas.1} parent=1 // pred_region
      %s21 = ssub.s32 1024, 1024
      %22 = vsyncadd [#allocation3], %s21
      %s23 = sshll.u32 [#allocation2], 4
      %s24 = int_to_ptr.vmem [resolvable:$true] %s23
      %29 = dma.hbm_to_vmem [thread:$0]  %s3, 1024, %s24, [#allocation3], 64, 64, 4
    $region17: #{prefix_encode_pallas.1} parent=1 // pred_fallthru
      _
    // Predicated region
    $region18: #{prefix_encode_pallas.1} parent=1 // pred_check
      _
    $region19: #{prefix_encode_pallas.1} parent=1 // pred_check_branch
      %31 = sbr.rel (0) target = $region21
    $region20: #{prefix_encode_pallas.1} parent=1 // pred_region
      _
    $region21: #{prefix_encode_pallas.1} parent=1 // pred_fallthru
      _
    // Predicated region
    $region22: #{prefix_encode_pallas.1} parent=1 // pred_check
      _
    $region23: #{prefix_encode_pallas.1} parent=1 // pred_check_branch
      %33 = sbr.rel (0) target = $region25
    $region24: #{prefix_encode_pallas.1} parent=1 // pred_region
      %34 = dma.done [#allocation3], 1024
    $region25: #{prefix_encode_pallas.1} parent=1 // pred_fallthru
      _
    %v36 = vld [vmem:[%s0] sm:$0xf]
    %v37 = vld [vmem:[%s0 + $0x4] sm:$0xf]
    %v38 = vld [vmem:[%s1] sm:$0xf]
    %v39 = vld [vmem:[%s1 + $0x4] sm:$0xf]
    %v40 = vld [vmem:[%s1 + $0x8] sm:$0xf]
    %v41 = vld [vmem:[%s1 + $0xc] sm:$0xf]
    %v42 = vld [vmem:[%s1 + $0x10] sm:$0xf]
    %v43 = vld [vmem:[%s1 + $0x14] sm:$0xf]
    %v44 = vld [vmem:[%s1 + $0x18] sm:$0xf]
    %v45 = vld [vmem:[%s1 + $0x1c] sm:$0xf]
    %v46 = vld [vmem:[%s1 + $0x20] sm:$0xf]
    %v47 = vld [vmem:[%s1 + $0x24] sm:$0xf]
    %v48 = vld [vmem:[%s1 + $0x28] sm:$0xf]
    %v49 = vld [vmem:[%s1 + $0x2c] sm:$0xf]
    %v50 = vld [vmem:[%s1 + $0x30] sm:$0xf]
    %v51 = vld [vmem:[%s1 + $0x34] sm:$0xf]
    %v52 = vld [vmem:[%s1 + $0x38] sm:$0xf]
    %v53 = vld [vmem:[%s1 + $0x3c] sm:$0xf]
    %v54 = vld [vmem:[%s2] sm:$0x1]
    %v56 = vlaneseq
    %v57 = vshrl.u32 %v56, 7
    %v58 = vsub.s32 0, %v57
    %v59 = vrot.slane %v54, %v58
    %v63 = vunpack.c.l.b16 %v36
    %v64 = vunpack.c.l.b16 %v37
    %v65 = vpack.c.b16 %v64, %v63
    %v83 = vunpack.c.l.b16 %v38
    %v84 = vunpack.c.l.b16 %v39
    %v85 = vunpack.c.l.b16 %v40
    %v86 = vunpack.c.l.b16 %v41
    %v87 = vunpack.c.l.b16 %v42
    %v88 = vunpack.c.l.b16 %v43
    %v89 = vunpack.c.l.b16 %v44
    %v90 = vunpack.c.l.b16 %v45
    %v91 = vunpack.c.l.b16 %v46
    %v92 = vunpack.c.l.b16 %v47
    %v93 = vunpack.c.l.b16 %v48
    %v94 = vunpack.c.l.b16 %v49
    %v95 = vunpack.c.l.b16 %v50
    %v96 = vunpack.c.l.b16 %v51
    %v97 = vunpack.c.l.b16 %v52
    %v98 = vunpack.c.l.b16 %v53
    %v99 = vpack.c.b16 %v84, %v83
    %v100 = vpack.c.b16 %v86, %v85
    %v101 = vpack.c.b16 %v88, %v87
    %v102 = vpack.c.b16 %v90, %v89
    %v103 = vpack.c.b16 %v92, %v91
    %v104 = vpack.c.b16 %v94, %v93
    %v105 = vpack.c.b16 %v96, %v95
    %v106 = vpack.c.b16 %v98, %v97
    %115 = vmatprep.subr.bf16.mxu0 0
    %116 = vmatpush1.bf16.msra.mxu0 %v106
    %117 = vmatprep.subr.bf16.mxu0 0
    %118 = vmatpush1.bf16.msra.mxu0 %v105
    %119 = vmatprep.subr.bf16.mxu0 0
    %120 = vmatpush1.bf16.msra.mxu0 %v104
    %121 = vmatprep.subr.bf16.mxu0 0
    %122 = vmatpush1.bf16.msra.mxu0 %v103
    %123 = vmatprep.subr.bf16.mxu0 0
    %124 = vmatpush1.bf16.msra.mxu0 %v102
    %125 = vmatprep.subr.bf16.mxu0 0
    %126 = vmatpush1.bf16.msra.mxu0 %v101
    %127 = vmatprep.subr.bf16.mxu0 0
    %128 = vmatpush1.bf16.msra.mxu0 %v100
    %129 = vmatprep.subr.bf16.mxu0 0
    %130 = vmatpush1.bf16.msra.mxu0 %v99
    %131 = vmatprep.subr.bf16.mxu0 0
    %132 = vmatpush2.bf16.msra.mxu0 0
    %133 = vmatprep.subr.bf16.mxu0 0
    %134 = vmatpush2.bf16.msra.mxu0 0
    %135 = vmatprep.subr.bf16.mxu0 0
    %136 = vmatpush2.bf16.msra.mxu0 0
    %137 = vmatprep.subr.bf16.mxu0 0
    %138 = vmatpush2.bf16.msra.mxu0 0
    %139 = vmatprep.subr.bf16.mxu0 0
    %140 = vmatpush2.bf16.msra.mxu0 0
    %141 = vmatprep.subr.bf16.mxu0 0
    %142 = vmatpush2.bf16.msra.mxu0 0
    %143 = vmatprep.subr.bf16.mxu0 0
    %144 = vmatpush2.bf16.msra.mxu0 0
    %145 = vmatprep.subr.bf16.mxu0 0
    %146 = vmatpush2.bf16.msra.mxu0 0
    %147 = vmatprep.mubr.bf16.mxu0 0
    %148 = vmatmul.mubr.bf16.gmra.mxu0 %v65
    %v149 = vpop.f32.mrf.mxu0
    %v150 = vadd.f32 %v59, %v149
    %v151 = vpop.f32.mrf.mxu0
    %v152 = vpop.f32.mrf.mxu0
    %v153 = vadd.f32 %v59, %v152
    %v154 = vpop.f32.mrf.mxu0
    %155 = vdwg.mxu0
    %v156 = vtanh.pop %v150
    %v157 = vtanh.pop %v153
    %v158 = vpack.c.bf16 %v157, %v156
    %v159 = vld [vmem:[#allocation2] sm:$0xf]
    %v160 = vld [vmem:[#allocation2 + $0x4] sm:$0xf]
    %v161 = vld [vmem:[#allocation2 + $0x8] sm:$0xf]
    %v162 = vld [vmem:[#allocation2 + $0xc] sm:$0xf]
    %v163 = vld [vmem:[#allocation2 + $0x10] sm:$0xf]
    %v164 = vld [vmem:[#allocation2 + $0x14] sm:$0xf]
    %v165 = vld [vmem:[#allocation2 + $0x18] sm:$0xf]
    %v166 = vld [vmem:[#allocation2 + $0x1c] sm:$0xf]
    %v167 = vld [vmem:[#allocation2 + $0x20] sm:$0xf]
    %v168 = vld [vmem:[#allocation2 + $0x24] sm:$0xf]
    %v169 = vld [vmem:[#allocation2 + $0x28] sm:$0xf]
    %v170 = vld [vmem:[#allocation2 + $0x2c] sm:$0xf]
    %v171 = vld [vmem:[#allocation2 + $0x30] sm:$0xf]
    %v172 = vld [vmem:[#allocation2 + $0x34] sm:$0xf]
    %v173 = vld [vmem:[#allocation2 + $0x38] sm:$0xf]
    %v174 = vld [vmem:[#allocation2 + $0x3c] sm:$0xf]
    %v175 = vld [vmem:[%s4] sm:$0x1]
    %v177 = vlaneseq
    %v178 = vshrl.u32 %v177, 7
    %v179 = vsub.s32 0, %v178
    %v180 = vrot.slane %v175, %v179
    %v198 = vunpack.c.l.b16 %v159
    %v199 = vunpack.c.l.b16 %v160
    %v200 = vunpack.c.l.b16 %v161
    %v201 = vunpack.c.l.b16 %v162
    %v202 = vunpack.c.l.b16 %v163
    %v203 = vunpack.c.l.b16 %v164
    %v204 = vunpack.c.l.b16 %v165
    %v205 = vunpack.c.l.b16 %v166
    %v206 = vunpack.c.l.b16 %v167
    %v207 = vunpack.c.l.b16 %v168
    %v208 = vunpack.c.l.b16 %v169
    %v209 = vunpack.c.l.b16 %v170
    %v210 = vunpack.c.l.b16 %v171
    %v211 = vunpack.c.l.b16 %v172
    %v212 = vunpack.c.l.b16 %v173
    %v213 = vunpack.c.l.b16 %v174
    %v214 = vpack.c.b16 %v199, %v198
    %v215 = vpack.c.b16 %v201, %v200
    %v216 = vpack.c.b16 %v203, %v202
    %v217 = vpack.c.b16 %v205, %v204
    %v218 = vpack.c.b16 %v207, %v206
    %v219 = vpack.c.b16 %v209, %v208
    %v220 = vpack.c.b16 %v211, %v210
    %v221 = vpack.c.b16 %v213, %v212
    %230 = vmatprep.subr.bf16.mxu0 0
    %231 = vmatpush1.bf16.msra.mxu0 %v221
    %232 = vmatprep.subr.bf16.mxu0 0
    %233 = vmatpush1.bf16.msra.mxu0 %v220
    %234 = vmatprep.subr.bf16.mxu0 0
    %235 = vmatpush1.bf16.msra.mxu0 %v219
    %236 = vmatprep.subr.bf16.mxu0 0
    %237 = vmatpush1.bf16.msra.mxu0 %v218
    %238 = vmatprep.subr.bf16.mxu0 0
    %239 = vmatpush1.bf16.msra.mxu0 %v217
    %240 = vmatprep.subr.bf16.mxu0 0
    %241 = vmatpush1.bf16.msra.mxu0 %v216
    %242 = vmatprep.subr.bf16.mxu0 0
    %243 = vmatpush1.bf16.msra.mxu0 %v215
    %244 = vmatprep.subr.bf16.mxu0 0
    %245 = vmatpush1.bf16.msra.mxu0 %v214
    %246 = vmatprep.subr.bf16.mxu0 0
    %247 = vmatpush2.bf16.msra.mxu0 0
    %248 = vmatprep.subr.bf16.mxu0 0
    %249 = vmatpush2.bf16.msra.mxu0 0
    %250 = vmatprep.subr.bf16.mxu0 0
    %251 = vmatpush2.bf16.msra.mxu0 0
    %252 = vmatprep.subr.bf16.mxu0 0
    %253 = vmatpush2.bf16.msra.mxu0 0
    %254 = vmatprep.subr.bf16.mxu0 0
    %255 = vmatpush2.bf16.msra.mxu0 0
    %256 = vmatprep.subr.bf16.mxu0 0
    %257 = vmatpush2.bf16.msra.mxu0 0
    %258 = vmatprep.subr.bf16.mxu0 0
    %259 = vmatpush2.bf16.msra.mxu0 0
    %260 = vmatprep.subr.bf16.mxu0 0
    %261 = vmatpush2.bf16.msra.mxu0 0
    %262 = vmatprep.mubr.bf16.mxu0 0
    %263 = vmatmul.mubr.bf16.gmra.mxu0 %v158
    %v264 = vpop.f32.mrf.mxu0
    %v265 = vadd.f32 %v180, %v264
    %v266 = vpop.f32.mrf.mxu0
    %v267 = vpop.f32.mrf.mxu0
    %v268 = vadd.f32 %v180, %v267
    %v269 = vpop.f32.mrf.mxu0
    %270 = vdwg.mxu0
    %271 = vst [vmem:[#allocation5] sm:$0xff] %v265
    %272 = vst [vmem:[#allocation5 + $0x8] sm:$0xff] %v268
    // Predicated region
    $region26: #{prefix_encode_pallas.1} parent=1 // pred_check
      _
    $region27: #{prefix_encode_pallas.1} parent=1 // pred_check_branch
      %274 = sbr.rel (0) target = $region29
    $region28: #{prefix_encode_pallas.1} parent=1 // pred_region
      %s276 = ssub.s32 256, 256
      %277 = vsyncadd [#allocation4], %s276
      %s278 = sshll.u32 [#allocation5], 4
      %s279 = int_to_ptr.vmem [resolvable:$true] %s278
      %284 = dma.vmem_to_hbm [thread:$0]  %s279, 256, %s5, [#allocation4], 128, 128, 8
    $region29: #{prefix_encode_pallas.1} parent=1 // pred_fallthru
      _
    // Predicated region
    $region30: #{prefix_encode_pallas.1} parent=1 // pred_check
      _
    $region31: #{prefix_encode_pallas.1} parent=1 // pred_check_branch
      %286 = sbr.rel (0) target = $region33
    $region32: #{prefix_encode_pallas.1} parent=1 // pred_region
      %287 = dma.done [#allocation4], 256
    $region33: #{prefix_encode_pallas.1} parent=1 // pred_fallthru
      _
    %288 = vsyncpa [#allocation3], 1
    %289 = vsyncpa [#allocation4], 1

</llo_original>
